<compile_context>
chip_gen: v5e
topology: v5e:2x2
jax: 0.10.0
libtpu: 0.0.40
codegen_flags: <defaults>
</compile_context>

<pallas_src>
import functools
from typing import NamedTuple

import jax
import jax.numpy as jnp
from jax import lax
from jax.experimental import pallas as pl
from jax.experimental.pallas import tpu as pltpu


_LANES = 128   # last dim of every block (lane width)


def _round_up(x, m):
    return ((x + m - 1) // m) * m


class _ChipConfig(NamedTuple):
    step_bytes: int     # target HBM bytes moved per grid step
    num_partials: int   # partial sums on the "parallel" axis (2 only on 2-TC chips)
    bf16_vpu: bool      # VPU has native bf16 (v6e / v7x)


def _chip_config() -> _ChipConfig:
    """Per-generation tuning knobs; conservative fallback for unknown chips."""
    try:
        kind = jax.devices()[0].device_kind.lower()
    except Exception:  # pragma: no cover - defensive
        kind = ""
    if "v6" in kind:          # v6e: 1 TC, 128 MiB VMEM, ~1.4 TB/s
        return _ChipConfig(step_bytes=16 << 20, num_partials=1, bf16_vpu=True)
    if "v5" in kind:          # v5e / v5p: 16 MiB default scoped VMEM, no bf16 VPU
        return _ChipConfig(step_bytes=8 << 20, num_partials=1, bf16_vpu=False)
    if "7" in kind:           # v7x: 2 TCs/chip, 64 MiB VMEM per TC, ~3.2 TB/s per TC
        return _ChipConfig(step_bytes=12 << 20, num_partials=2, bf16_vpu=True)
    return _ChipConfig(step_bytes=8 << 20, num_partials=1, bf16_vpu=False)


def _quantile_loss_kernel(preds_ref, target_ref, out_ref, acc_ref, *,
                          quantiles, rows, block_rows, steps_per_partial,
                          compute_dtype):
    """One grid step: accumulate pinball loss over a (Q, block_rows, 128) tile."""
    c = pl.program_id(0)   # partial-sum index ("parallel": 2 TCs on v7x)
    s = pl.program_id(1)   # reduction step   ("arbitrary")

    @pl.when(s == 0)
    def _init():
        acc_ref[...] = jnp.zeros_like(acc_ref)

    # Elementwise pinball loss on vregs.  HBM/VMEM keep the native dtype; the
    # math runs in `compute_dtype` (bf16 on v6e/v7x for bf16 inputs, else f32)
    # and is upcast to f32 only when summed.
    t = target_ref[...].astype(compute_dtype)              # (block_rows, 128)
    total = jnp.zeros(t.shape, jnp.float32)
    for i, q in enumerate(quantiles):                      # static unroll, Q is tiny
        e = t - preds_ref[i].astype(compute_dtype)         # (block_rows, 128)
        pin = jnp.maximum((q - 1.0) * e, q * e)            # stays in compute_dtype
        total = total + pin.astype(jnp.float32)

    def _fold(x):
        # (block_rows, 128) -> (8, 128): sum sublane groups; pure vreg adds,
        # so the persistent accumulator is a single vreg.
        return jnp.sum(x.reshape(block_rows // 8, 8, _LANES), axis=0)

    raw_block = c * steps_per_partial + s        # un-clamped logical block id
    block_start = raw_block * block_rows
    is_full = block_start + block_rows <= rows
    is_partial = jnp.logical_and(block_start < rows, jnp.logical_not(is_full))
    # (blocks with block_start >= rows are clamped duplicates: skipped entirely)

    @pl.when(is_full)
    def _acc_full():                             # steady state: plain accumulate
        acc_ref[...] += _fold(total)

    @pl.when(is_partial)
    def _acc_partial():                          # only the block straddling `rows`
        row = block_start + lax.broadcasted_iota(jnp.int32, total.shape, 0)
        acc_ref[...] += _fold(jnp.where(row < rows, total, 0.0))

    @pl.when(s == pl.num_programs(1) - 1)
    def _finalize():
        out_ref[...] = acc_ref[...][None]        # (1, 8, 128); wrapper sums it


def _quantile_loss_qn(preds_qn, target_n, quantiles, *, block_rows=None):
    """preds_qn: (Q, N) quantile-major, target_n: (N,). Returns scalar f32 loss."""
    q_count, n = preds_qn.shape
    assert target_n.shape == (n,)
    assert q_count == len(quantiles)
    quantiles = tuple(float(q) for q in quantiles)

    cfg = _chip_config()
    pe = jnp.dtype(preds_qn.dtype).itemsize
    te = jnp.dtype(target_n.dtype).itemsize
    sub = max(8, 32 // pe, 32 // te)             # sublane multiple (8 f32, 16 bf16)

    rows = n // _LANES                            # full 128-wide rows for the kernel
    n_main = rows * _LANES
    main_sum = jnp.zeros((), jnp.float32)

    if rows > 0:
        bytes_per_row = _LANES * (q_count * pe + te)
        if block_rows is None:
            # Target a per-step HBM payload sized for the chip's bandwidth so
            # the ~0.35us/step pipeline overhead stays in the low single digits.
            block_rows = max(sub, cfg.step_bytes // bytes_per_row)
        br = max(sub, min(_round_up(block_rows, sub), _round_up(rows, sub)))
        num_blocks = pl.cdiv(rows, br)
        num_partials = cfg.num_partials if num_blocks >= cfg.num_partials else 1
        steps = pl.cdiv(num_blocks, num_partials)
        last_block = num_blocks - 1

        compute_dtype = (jnp.bfloat16
                         if (cfg.bf16_vpu
                             and preds_qn.dtype == jnp.bfloat16
                             and target_n.dtype == jnp.bfloat16)
                         else jnp.float32)

        # Free, contiguous views when N is a multiple of 128 (the common case);
        # otherwise the <128-element remainder is split off to the JAX tail.
        preds_main = preds_qn[:, :n_main].reshape(q_count, rows, _LANES)
        target_main = target_n[:n_main].reshape(rows, _LANES)

        def row_block(c, s):
            # Clamp so a core whose share overruns the array re-reads a valid
            # block; its contribution is skipped inside the kernel.
            return jnp.minimum(c * steps + s, last_block)

        kernel = functools.partial(
            _quantile_loss_kernel,
            quantiles=quantiles, rows=rows, block_rows=br,
            steps_per_partial=steps, compute_dtype=compute_dtype)

        # Double-buffered inputs + single-vreg accumulator + slack.
        step_bytes = br * bytes_per_row
        vmem_limit = min(max(2 * step_bytes + (2 << 20), 32 << 20), 60 << 20)

        cost = pl.CostEstimate(
            flops=5 * q_count * n_main,
            transcendentals=0,
            bytes_accessed=n_main * (q_count * pe + te)
                           + num_partials * 8 * _LANES * 4)

        partials = pl.pallas_call(
            kernel,
            out_shape=jax.ShapeDtypeStruct((num_partials, 8, _LANES), jnp.float32),
            grid=(num_partials, steps),
            in_specs=[
                pl.BlockSpec((q_count, br, _LANES),
                             lambda c, s: (0, row_block(c, s), 0)),
                pl.BlockSpec((br, _LANES),
                             lambda c, s: (row_block(c, s), 0)),
            ],
            out_specs=pl.BlockSpec((1, 8, _LANES), lambda c, s: (c, 0, 0)),
            scratch_shapes=[pltpu.VMEM((8, _LANES), jnp.float32)],
            compiler_params=pltpu.CompilerParams(
                dimension_semantics=("parallel", "arbitrary"),
                vmem_limit_bytes=int(vmem_limit)),
            cost_estimate=cost,
        )(preds_main, target_main)
        main_sum = jnp.sum(partials)   # tiny (num_partials*8*128) epilogue reduce

    # Tail: fewer than 128 leftover (b, t) positions; negligible, plain JAX.
    tail_sum = jnp.zeros((), jnp.float32)
    if n_main < n:
        p_tail = preds_qn[:, n_main:].astype(jnp.float32)     # (Q, n_tail)
        t_tail = target_n[n_main:].astype(jnp.float32)        # (n_tail,)
        e = t_tail[None, :] - p_tail
        qv = jnp.asarray(quantiles, jnp.float32)[:, None]
        tail_sum = jnp.sum(jnp.maximum((qv - 1.0) * e, qv * e))

    return (main_sum + tail_sum) / jnp.float32(n)


def quantile_loss_qbt(preds_qbt, target, quantiles, *, block_rows=None):
    """Preferred entry point: preds already quantile-major, shape (Q, B, T).

    No HBM-side relayout of the (large) prediction tensor happens here: only
    free, contiguous reshapes precede the kernel, so end-to-end cost is one
    streaming read of preds + target.  Have the model emit quantile-major
    predictions and call this directly.
    """
    q, b, t = preds_qbt.shape
    assert target.shape == (b, t)
    return _quantile_loss_qn(preds_qbt.reshape(q, b * t),
                             target.reshape(b * t), quantiles,
                             block_rows=block_rows)


def quantile_loss(preds, target, quantiles, *, block_rows=None):
    """Drop-in for the PyTorch module: preds (B, T, Q), target (B, T) -> scalar.

    WARNING (performance): preds' innermost axis is the tiny quantile axis, so
    the data must become quantile-major to get lane-dense blocks.  This path
    pays one XLA transpose -- an extra full HBM read+write pass over preds that
    can dominate the whole (HBM-roofline-bound) loss.  Callers should either
    (a) call this under jax.jit together with the op producing `preds` so XLA
    can fuse the transpose into the producer, or (b) preferably emit
    quantile-major (Q, B, T) predictions and call `quantile_loss_qbt` directly.
    """
    b, t, q = preds.shape
    assert target.shape == (b, t)
    assert q == len(quantiles)
    # TODO(synk): have the model emit (Q, B, T) predictions so this relayout
    # (the only remaining extra HBM pass) disappears entirely.
    preds_qbt = jnp.transpose(preds, (2, 0, 1))
    return quantile_loss_qbt(preds_qbt, target, quantiles, block_rows=block_rows)


def _reference_quantile_loss(preds, target, quantiles):
    # Direct JAX transcription of the PyTorch forward, for verification.
    losses = []
    for i, q in enumerate(quantiles):
        errors = target - preds[:, :, i]
        losses.append(jnp.maximum((q - 1.0) * errors, q * errors)[:, None, :])
    return jnp.mean(jnp.sum(jnp.concatenate(losses, axis=1), axis=1))


if __name__ == "__main__":
    quantiles = [0.1, 0.5, 0.9]
    key = jax.random.PRNGKey(0)
    k1, k2, k3, k4, k5, k6 = jax.random.split(key, 6)

    # Config 1: multi-step accumulation, a masked partial row-block, a clamped
    # duplicate block (on 2-partial chips) and a <128-element tail.
    b1, t1 = 4, 560                      # N = 2240 = 17*128 + 64
    preds1 = jax.random.normal(k1, (b1, t1, len(quantiles)), dtype=jnp.float32)
    target1 = jax.random.normal(k2, (b1, t1), dtype=jnp.float32)
    loss1 = jax.block_until_ready(
        quantile_loss(preds1, target1, quantiles, block_rows=8))
    ref1 = _reference_quantile_loss(preds1, target1, quantiles)
    assert jnp.allclose(loss1, ref1, rtol=1e-5, atol=1e-5), (loss1, ref1)

    # Config 2: generation-default block size, exact tiling (N = 1024).
    b2, t2 = 2, 512
    preds2 = jax.random.normal(k3, (b2, t2, len(quantiles)), dtype=jnp.float32)
    target2 = jax.random.normal(k4, (b2, t2), dtype=jnp.float32)
    loss2 = jax.block_until_ready(quantile_loss(preds2, target2, quantiles))
    ref2 = _reference_quantile_loss(preds2, target2, quantiles)
    assert jnp.allclose(loss2, ref2, rtol=1e-5, atol=1e-5), (loss2, ref2)

    # Config 3: bf16 inputs via the preferred quantile-major entry point
    # (bf16 vreg math on v6e/v7x, f32 elsewhere; f32 accumulation everywhere).
    b3, t3 = 3, 730                      # N = 2190 = 17*128 + 14
    preds3 = jax.random.normal(
        k5, (len(quantiles), b3, t3), dtype=jnp.float32).astype(jnp.bfloat16)
    target3 = jax.random.normal(k6, (b3, t3), dtype=jnp.float32).astype(jnp.bfloat16)
    loss3 = jax.block_until_ready(quantile_loss_qbt(preds3, target3, quantiles))
    ref3 = _reference_quantile_loss(
        jnp.transpose(preds3, (1, 2, 0)).astype(jnp.float32),
        target3.astype(jnp.float32), quantiles)
    assert jnp.allclose(loss3, ref3, rtol=2e-2, atol=1e-3), (loss3, ref3)

    print("KERNEL_OK")
</pallas_src>

<mosaic_0001>
module attributes {stable_mosaic.version = 11 : i64} {
  func.func @_quantile_loss_kernel(%arg0: i32, %arg1: i32, %arg2: memref<3x8x128xf32, #tpu.memory_space<vmem>>, %arg3: memref<8x128xf32, #tpu.memory_space<vmem>>, %arg4: memref<1x8x128xf32, #tpu.memory_space<vmem>>, %arg5: memref<8x128xf32, #tpu.memory_space<vmem>>) attributes {dimension_semantics = [#tpu.dimension_semantics<parallel>, #tpu.dimension_semantics<arbitrary>], iteration_bounds = array<i64: 1, 3>, scalar_prefetch = 0 : i64, scratch_operands = 1 : i64, tpu.core_type = #tpu.core_type<tc>, window_params = [{transform_indices = @transform_0, window_bounds = array<i64: 3, 8, 128>}, {transform_indices = @transform_1, window_bounds = array<i64: 8, 128>}, {transform_indices = @transform_2, window_bounds = array<i64: 1, 8, 128>}]} {
    %c0_i32 = arith.constant 0 : i32
    %0 = arith.cmpi eq, %arg1, %c0_i32 : i32
    %1 = arith.extui %0 : i1 to i32
    %c0_i32_0 = arith.constant 0 : i32
    %2 = arith.cmpi ne, %1, %c0_i32_0 : i32
    scf.if %2 {
      %cst_20 = arith.constant 0.000000e+00 : f32
      %47 = vector.broadcast %cst_20 : f32 to vector<8x128xf32>
      %c0_21 = arith.constant 0 : index
      %c0_22 = arith.constant 0 : index
      %48 = vector.load %arg5[%c0_21, %c0_22] : memref<8x128xf32, #tpu.memory_space<vmem>>, vector<8x128xf32>
      tpu.vector_store %arg5[%c0_21, %c0_22], %47 {strides = array<i32>} : memref<8x128xf32, #tpu.memory_space<vmem>>, vector<8x128xf32>,
    } else {
    }
    %c0 = arith.constant 0 : index
    %c0_1 = arith.constant 0 : index
    %3 = vector.load %arg3[%c0, %c0_1] : memref<8x128xf32, #tpu.memory_space<vmem>>, vector<8x128xf32>
    %cst = arith.constant 0.000000e+00 : f32
    %4 = vector.broadcast %cst : f32 to vector<8x128xf32>
    %c0_2 = arith.constant 0 : index
    %c0_3 = arith.constant 0 : index
    %c0_4 = arith.constant 0 : index
    %5 = vector.load %arg2[%c0_2, %c0_3, %c0_4] : memref<3x8x128xf32, #tpu.memory_space<vmem>>, vector<1x8x128xf32>
    %6 = vector.shape_cast %5 : vector<1x8x128xf32> to vector<8x128xf32>
    %7 = arith.subf %3, %6 : vector<8x128xf32>
    %cst_5 = arith.constant -0.899999976 : f32
    %8 = vector.broadcast %cst_5 : f32 to vector<8x128xf32>
    %9 = arith.mulf %8, %7 : vector<8x128xf32>
    %cst_6 = arith.constant 1.000000e-01 : f32
    %10 = vector.broadcast %cst_6 : f32 to vector<8x128xf32>
    %11 = arith.mulf %10, %7 : vector<8x128xf32>
    %12 = arith.maximumf %9, %11 : vector<8x128xf32>
    %13 = arith.addf %4, %12 : vector<8x128xf32>
    %c1 = arith.constant 1 : index
    %c0_7 = arith.constant 0 : index
    %c0_8 = arith.constant 0 : index
    %14 = vector.load %arg2[%c1, %c0_7, %c0_8] : memref<3x8x128xf32, #tpu.memory_space<vmem>>, vector<1x8x128xf32>
    %15 = vector.shape_cast %14 : vector<1x8x128xf32> to vector<8x128xf32>
    %16 = arith.subf %3, %15 : vector<8x128xf32>
    %cst_9 = arith.constant -5.000000e-01 : f32
    %17 = vector.broadcast %cst_9 : f32 to vector<8x128xf32>
    %18 = arith.mulf %17, %16 : vector<8x128xf32>
    %cst_10 = arith.constant 5.000000e-01 : f32
    %19 = vector.broadcast %cst_10 : f32 to vector<8x128xf32>
    %20 = arith.mulf %19, %16 : vector<8x128xf32>
    %21 = arith.maximumf %18, %20 : vector<8x128xf32>
    %22 = arith.addf %13, %21 : vector<8x128xf32>
    %c2 = arith.constant 2 : index
    %c0_11 = arith.constant 0 : index
    %c0_12 = arith.constant 0 : index
    %23 = vector.load %arg2[%c2, %c0_11, %c0_12] : memref<3x8x128xf32, #tpu.memory_space<vmem>>, vector<1x8x128xf32>
    %24 = vector.shape_cast %23 : vector<1x8x128xf32> to vector<8x128xf32>
    %25 = arith.subf %3, %24 : vector<8x128xf32>
    %cst_13 = arith.constant -1.000000e-01 : f32
    %26 = vector.broadcast %cst_13 : f32 to vector<8x128xf32>
    %27 = arith.mulf %26, %25 : vector<8x128xf32>
    %cst_14 = arith.constant 0.899999976 : f32
    %28 = vector.broadcast %cst_14 : f32 to vector<8x128xf32>
    %29 = arith.mulf %28, %25 : vector<8x128xf32>
    %30 = arith.maximumf %27, %29 : vector<8x128xf32>
    %31 = arith.addf %22, %30 : vector<8x128xf32>
    %c3_i32 = arith.constant 3 : i32
    %32 = arith.muli %arg0, %c3_i32 : i32
    %33 = arith.addi %32, %arg1 : i32
    %c8_i32 = arith.constant 8 : i32
    %34 = arith.muli %33, %c8_i32 : i32
    %c8_i32_15 = arith.constant 8 : i32
    %35 = arith.addi %34, %c8_i32_15 : i32
    %c17_i32 = arith.constant 17 : i32
    %36 = arith.cmpi sle, %35, %c17_i32 : i32
    %c17_i32_16 = arith.constant 17 : i32
    %37 = arith.cmpi slt, %34, %c17_i32_16 : i32
    %true = arith.constant true
    %38 = arith.xori %36, %true : i1
    %39 = arith.andi %37, %38 : i1
    %40 = arith.extui %36 : i1 to i32
    %c0_i32_17 = arith.constant 0 : i32
    %41 = arith.cmpi ne, %40, %c0_i32_17 : i32
    scf.if %41 {
      %c0_20 = arith.constant 0 : index
      %c0_21 = arith.constant 0 : index
      %47 = vector.load %arg5[%c0_20, %c0_21] : memref<8x128xf32, #tpu.memory_space<vmem>>, vector<8x128xf32>
      %48 = vector.shape_cast %31 : vector<8x128xf32> to vector<1x8x128xf32>
      %cst_22 = arith.constant dense<0.000000e+00> : vector<8x128xf32>
      %49 = vector.multi_reduction <add>, %48, %cst_22 [0] : vector<1x8x128xf32> to vector<8x128xf32>
      %50 = arith.addf %47, %49 : vector<8x128xf32>
      %c0_23 = arith.constant 0 : index
      %c0_24 = arith.constant 0 : index
      %51 = vector.load %arg5[%c0_23, %c0_24] : memref<8x128xf32, #tpu.memory_space<vmem>>, vector<8x128xf32>
      tpu.vector_store %arg5[%c0_23, %c0_24], %50 {strides = array<i32>} : memref<8x128xf32, #tpu.memory_space<vmem>>, vector<8x128xf32>,
    } else {
    }
    %42 = arith.extui %39 : i1 to i32
    %c0_i32_18 = arith.constant 0 : i32
    %43 = arith.cmpi ne, %42, %c0_i32_18 : i32
    scf.if %43 {
      %47 = tpu.iota {dimensions = array<i32: 0>} : vector<8x128xi32>
      %48 = vector.broadcast %34 : i32 to vector<8x128xi32>
      %49 = arith.addi %48, %47 : vector<8x128xi32>
      %c0_20 = arith.constant 0 : index
      %c0_21 = arith.constant 0 : index
      %50 = vector.load %arg5[%c0_20, %c0_21] : memref<8x128xf32, #tpu.memory_space<vmem>>, vector<8x128xf32>
      %c17_i32_22 = arith.constant 17 : i32
      %51 = vector.broadcast %c17_i32_22 : i32 to vector<8x128xi32>
      %52 = arith.cmpi slt, %49, %51 : vector<8x128xi32>
      %cst_23 = arith.constant 0.000000e+00 : f32
      %53 = vector.broadcast %cst_23 : f32 to vector<8x128xf32>
      %54 = arith.select %52, %31, %53 : vector<8x128xi1>, vector<8x128xf32>
      %55 = vector.shape_cast %54 : vector<8x128xf32> to vector<1x8x128xf32>
      %cst_24 = arith.constant dense<0.000000e+00> : vector<8x128xf32>
      %56 = vector.multi_reduction <add>, %55, %cst_24 [0] : vector<1x8x128xf32> to vector<8x128xf32>
      %57 = arith.addf %50, %56 : vector<8x128xf32>
      %c0_25 = arith.constant 0 : index
      %c0_26 = arith.constant 0 : index
      %58 = vector.load %arg5[%c0_25, %c0_26] : memref<8x128xf32, #tpu.memory_space<vmem>>, vector<8x128xf32>
      tpu.vector_store %arg5[%c0_25, %c0_26], %57 {strides = array<i32>} : memref<8x128xf32, #tpu.memory_space<vmem>>, vector<8x128xf32>,
    } else {
    }
    %c2_i32 = arith.constant 2 : i32
    %44 = arith.cmpi eq, %arg1, %c2_i32 : i32
    %45 = arith.extui %44 : i1 to i32
    %c0_i32_19 = arith.constant 0 : i32
    %46 = arith.cmpi ne, %45, %c0_i32_19 : i32
    scf.if %46 {
      %c0_20 = arith.constant 0 : index
      %c0_21 = arith.constant 0 : index
      %47 = vector.load %arg5[%c0_20, %c0_21] : memref<8x128xf32, #tpu.memory_space<vmem>>, vector<8x128xf32>
      %48 = vector.shape_cast %47 : vector<8x128xf32> to vector<1x8x128xf32>
      %c0_22 = arith.constant 0 : index
      %c0_23 = arith.constant 0 : index
      %c0_24 = arith.constant 0 : index
      %49 = vector.load %arg4[%c0_22, %c0_23, %c0_24] : memref<1x8x128xf32, #tpu.memory_space<vmem>>, vector<1x8x128xf32>
      tpu.vector_store %arg4[%c0_22, %c0_23, %c0_24], %48 {strides = array<i32>} : memref<1x8x128xf32, #tpu.memory_space<vmem>>, vector<1x8x128xf32>,
    } else {
    }
    return
  }
  func.func @transform_0(%arg0: i32, %arg1: i32) -> (i32, i32, i32) {
    %c3_i32 = arith.constant 3 : i32
    %0 = arith.muli %arg0, %c3_i32 : i32
    %1 = arith.addi %0, %arg1 : i32
    %c2_i32 = arith.constant 2 : i32
    %2 = arith.minsi %1, %c2_i32 : i32
    %c0_i32 = arith.constant 0 : i32
    %c0_i32_0 = arith.constant 0 : i32
    %c0_i32_1 = arith.constant 0 : i32
    return %c0_i32, %2, %c0_i32_0 : i32, i32, i32
  }
  func.func @transform_1(%arg0: i32, %arg1: i32) -> (i32, i32) {
    %c3_i32 = arith.constant 3 : i32
    %0 = arith.muli %arg0, %c3_i32 : i32
    %1 = arith.addi %0, %arg1 : i32
    %c2_i32 = arith.constant 2 : i32
    %2 = arith.minsi %1, %c2_i32 : i32
    %c0_i32 = arith.constant 0 : i32
    %c0_i32_0 = arith.constant 0 : i32
    return %2, %c0_i32 : i32, i32
  }
  func.func @transform_2(%arg0: i32, %arg1: i32) -> (i32, i32, i32) {
    %c0_i32 = arith.constant 0 : i32
    %c0_i32_0 = arith.constant 0 : i32
    %c0_i32_1 = arith.constant 0 : i32
    return %arg0, %c0_i32, %c0_i32_0 : i32, i32, i32
  }
}

</mosaic_0001>

<llo_original>
// kernel: tpu_custom_call.1
$region0: #{tpu_custom_call.1}
  #allocation0 [shape = 'u32[]', space=smem, size = 0x4, offset = 0x4, fixed_abs, tag = 'smem constant byte address 0x4 - core index']
  #allocation1 [shape = 'u32[72,128]{1,0:T(1,128)}', space=vmem, size = 0x9000, scoped, tag = 'internal scratch']
  #allocation2 [shape = 'f32[8,128]{1,0:T(8,128)}', space=vmem, size = 0x1000, scoped, tag = 'scratch operand']
  %s0 = inlined_call_operand.vmem [shape: f32[3,17,128], index: 0, kind: input, shape index: {}]
  %s1 = inlined_call_operand.vmem [shape: f32[17,128], index: 1, kind: input, shape index: {}]
  %s2 = inlined_call_operand.hbm [shape: f32[1,8,128], index: 2, kind: output, shape index: {}]
  %s3 = sld [smem:[#allocation0]]
  $region95: #{tpu_custom_call.1} parent=0
    _
  %s5 = ssub.s32 1, %s3
  %s6 = scalar_select 0, %s5, %s3
  $region1: #{tpu_custom_call.1} parent=0
    #allocation3 [shape = 'u8[24576]{0}', space=vmem, size = 0x6000, scoped, tag = 'input window, operand 0']
    #allocation4 [shape = 'u8[4096]{0}', space=vmem, size = 0x1000, scoped, tag = 'output window, operand 0, single buffered']
    #allocation5 [shape = 's32[2]{0}', space=sflag, size = 0x8, scoped, tag = 'scoped memory for tpu_custom_call.1']
    %7 = vsyncpa [#allocation5], 0
    loop: start=0, step=1, limit=5
    $region2: #{tpu_custom_call.1} parent=1 // loop_pre_header
      _
    $region3: #{tpu_custom_call.1} parent=1 // loop_header
      %s9 = sphi 0, %s13
      %p10 = scmp.ge.s32.totalorder %s9, 5
      %s16 = sphi 0, %s28
      %s17 = sphi 0, %s24
      %s18 = sphi 0, %s16
      %s19 = sphi 0, %s17
      %s20 = sphi 0, %s18
      %s21 = sphi 0, %s19
      %s39 = sphi 0, %s41
      %s42 = sphi 0, %s39
      %s43 = sphi 0, %s42
      %s59 = sphi 0, %s43
      %s73 = sphi 0, %s75
      %s76 = sphi 0, %s73
      %s77 = sphi 0, %s76
      %s93 = sphi 0, %s77
      %s99 = sphi 0, %s101
      %s102 = sphi 0, %s99
      %s103 = sphi 0, %s102
      %s119 = sphi 0, %s103
    $region4: #{tpu_custom_call.1} parent=1 // loop_header_branch
      %12 = sbr.rel (%p10) target = $region8
    $region5: #{tpu_custom_call.1} parent=1 // loop_body
      %s14 = ssub.s32 %s9, 1
      %s15 = ssub.s32 %s9, 2
      %s22 = sadd.s32 1, %s17
      %p23 = scmp.ge.s32.totalorder %s22, 3
      %s24 = scalar_select %p23, 0, %s22
      %s25 = sadd.s32 1, %s16
      %s26 = scalar_select %p23, %s25, %s16
      %p27 = scmp.ge.s32.totalorder %s26, 1
      %s28 = scalar_select %p27, 0, %s26
      %s29 = smul.u32 %s16, 3
      %s30 = sadd.s32 %s29, %s17
      %p31 = scmp.lt.s32.totalorder %s30, 2
      %s32 = scalar_select %p31, %s30, 2
      %s33 = smul.u32 %s28, 3
      %s34 = sadd.s32 %s33, %s24
      %p35 = scmp.lt.s32.totalorder %s34, 2
      %s36 = scalar_select %p35, %s34, 2
      %s37 = ssub.s32 %s32, %s36
      %p38 = scmp.eq.s32.totalorder %s37, 0
      %s40 = sadd.s32 %s39, 1
      %s41 = scalar_select %p38, %s39, %s40
      %p44 = pneg %p38
      %p45 = scmp.eq.s32.totalorder %s9, 2
      %p46 = por %p44, %p45
      %p47 = scmp.ne.s32.totalorder %s39, %s42
      %p48 = scmp.eq.s32.totalorder %s9, 0
      %p49 = por %p47, %p48
      %p50 = scmp.ne.s32.totalorder %s39, %s42
      %p51 = scmp.eq.s32.totalorder %s14, 2
      %p52 = por %p50, %p51
      %p53 = scmp.ne.s32.totalorder %s42, %s43
      %p54 = scmp.eq.s32.totalorder %s14, 0
      %p55 = por %p53, %p54
      %p56 = scmp.ne.s32.totalorder %s42, %s43
      %p57 = scmp.eq.s32.totalorder %s15, 2
      %p58 = por %p56, %p57
      %p60 = scmp.ne.s32.totalorder %s43, %s59
      %p61 = scmp.eq.s32.totalorder %s15, 0
      %p62 = por %p60, %p61
      %s63 = smul.u32 %s16, 3
      %s64 = sadd.s32 %s63, %s17
      %p65 = scmp.lt.s32.totalorder %s64, 2
      %s66 = scalar_select %p65, %s64, 2
      %s67 = smul.u32 %s28, 3
      %s68 = sadd.s32 %s67, %s24
      %p69 = scmp.lt.s32.totalorder %s68, 2
      %s70 = scalar_select %p69, %s68, 2
      %s71 = ssub.s32 %s66, %s70
      %p72 = scmp.eq.s32.totalorder %s71, 0
      %s74 = sadd.s32 %s73, 1
      %s75 = scalar_select %p72, %s73, %s74
      %p78 = pneg %p72
      %p79 = scmp.eq.s32.totalorder %s9, 2
      %p80 = por %p78, %p79
      %p81 = scmp.ne.s32.totalorder %s73, %s76
      %p82 = scmp.eq.s32.totalorder %s9, 0
      %p83 = por %p81, %p82
      %p84 = scmp.ne.s32.totalorder %s73, %s76
      %p85 = scmp.eq.s32.totalorder %s14, 2
      %p86 = por %p84, %p85
      %p87 = scmp.ne.s32.totalorder %s76, %s77
      %p88 = scmp.eq.s32.totalorder %s14, 0
      %p89 = por %p87, %p88
      %p90 = scmp.ne.s32.totalorder %s76, %s77
      %p91 = scmp.eq.s32.totalorder %s15, 2
      %p92 = por %p90, %p91
      %p94 = scmp.ne.s32.totalorder %s77, %s93
      %p95 = scmp.eq.s32.totalorder %s15, 0
      %p96 = por %p94, %p95
      %s97 = ssub.s32 %s16, %s28
      %p98 = scmp.eq.s32.totalorder %s97, 0
      %s100 = sadd.s32 %s99, 1
      %s101 = scalar_select %p98, %s99, %s100
      %p104 = pneg %p98
      %p105 = scmp.eq.s32.totalorder %s9, 2
      %p106 = por %p104, %p105
      %p107 = scmp.ne.s32.totalorder %s99, %s102
      %p108 = scmp.eq.s32.totalorder %s9, 0
      %p109 = por %p107, %p108
      %p110 = scmp.ne.s32.totalorder %s99, %s102
      %p111 = scmp.eq.s32.totalorder %s14, 2
      %p112 = por %p110, %p111
      %p113 = scmp.ne.s32.totalorder %s102, %s103
      %p114 = scmp.eq.s32.totalorder %s14, 0
      %p115 = por %p113, %p114
      %p116 = scmp.ne.s32.totalorder %s102, %s103
      %p117 = scmp.eq.s32.totalorder %s15, 2
      %p118 = por %p116, %p117
      %p120 = scmp.ne.s32.totalorder %s103, %s119
      %p121 = scmp.eq.s32.totalorder %s15, 0
      %p122 = por %p120, %p121
      %p123 = scmp.le.s32.totalorder 1, %s9
      %p124 = scmp.lt.s32.totalorder %s9, 4
      %p125 = pnand %p123, %p124
      %p126 = pneg %p125
      // Predicated region
      $region9: #{tpu_custom_call.1} parent=5 // pred_check
        _
      $region10: #{tpu_custom_call.1} parent=5 // pred_check_branch
        %128 = sbr.rel (%p125) target = $region12
      $region11: #{tpu_custom_call.1} parent=5 // pred_region
        %s129 = ssub.s32 %s9, 1
      $region12: #{tpu_custom_call.1} parent=5 // pred_fallthru
        _
      %p130 = scmp.lt.s32.totalorder %s9, 3
      // Predicated region
      $region13: #{tpu_custom_call.1} parent=5 // pred_check
        %p131 = pneg %p130
      $region14: #{tpu_custom_call.1} parent=5 // pred_check_branch
        %133 = sbr.rel (%p131) target = $region16
      $region15: #{tpu_custom_call.1} parent=5 // pred_region
        // Predicated region
        $region17: #{tpu_custom_call.1} parent=15 // pred_check
          %p134 = pneg %p49
        $region18: #{tpu_custom_call.1} parent=15 // pred_check_branch
          %136 = sbr.rel (%p134) target = $region20
        $region19: #{tpu_custom_call.1} parent=15 // pred_region
          %s137 = sand.u32 %s39, 1
          %s138 = sand.u32 %s39, 1
          %s139 = smul.addr %s138, 24
          %s140 = scalar_lea.vmem [#allocation3], %s139
          %s141 = smul.u32 %s16, 3
          %s142 = sadd.s32 %s141, %s17
          %p143 = scmp.lt.s32.totalorder %s142, 2
          %s144 = scalar_select %p143, %s142, 2
          %s145 = smul.addr %s144, 8
          %s146 = scalar_lea.vmem %s0, %s145
          // Predicated region
          $region21: #{tpu_custom_call.1} parent=19 // pred_check
            _
          $region22: #{tpu_custom_call.1} parent=19 // pred_check_branch
            %148 = sbr.rel (0) target = $region24
          $region23: #{tpu_custom_call.1} parent=19 // pred_region
            // Predicated region
            $region25: #{tpu_custom_call.1} parent=23 // pred_check
              _
            $region26: #{tpu_custom_call.1} parent=23 // pred_check_branch
              %150 = sbr.rel (0) target = $region28
            $region27: #{tpu_custom_call.1} parent=23 // pred_region
              // Predicated region
              $region40: #{tpu_custom_call.1} parent=27 // pred_check
                _
              $region41: #{tpu_custom_call.1} parent=27 // pred_check_branch
                %170 = sbr.rel (0) target = $region43
              $region42: #{tpu_custom_call.1} parent=27 // pred_region
                loop: start=0, step=1, limit=1
                $region44: #{tpu_custom_call.1} parent=42 // loop_pre_header
                  _
                $region45: #{tpu_custom_call.1} parent=42 // loop_header
                  %s172 = sphi 0, %s176
                  %p173 = scmp.ge.s32.totalorder %s172, 1
                  %s177 = sphi %s146, %s146
                  %s178 = sphi %s140, %s140
                $region46: #{tpu_custom_call.1} parent=42 // loop_header_branch
                  %175 = sbr.rel (%p173) target = $region50
                $region47: #{tpu_custom_call.1} parent=42 // loop_body
                  %v179 = vld [vmem:[%s177] sm:$0xff]
                  %180 = vst [vmem:[%s178] sm:$0xff] %v179
                  %v181 = vld [vmem:[%s177 + $0x18] sm:$0xff]
                  %182 = vst [vmem:[%s178 + $0x8] sm:$0xff] %v181
                  %v183 = vld [vmem:[%s177 + $0x30] sm:$0xff]
                  %184 = vst [vmem:[%s178 + $0x10] sm:$0xff] %v183
                $region48: #{tpu_custom_call.1} parent=42 // loop_footer
                  %s176 = sadd.s32 1, %s172
                $region49: #{tpu_custom_call.1} parent=42 // loop_footer_branch
                  %171 = sbr.rel target = $region45
                $region50: #{tpu_custom_call.1} parent=42 // loop_exit
                  _
              $region43: #{tpu_custom_call.1} parent=27 // pred_fallthru
                _
              // Predicated region
              $region51: #{tpu_custom_call.1} parent=27 // pred_check
                _
              $region52: #{tpu_custom_call.1} parent=27 // pred_check_branch
                %186 = sbr.rel target = $region54
              $region53: #{tpu_custom_call.1} parent=27 // pred_region
                _
              $region54: #{tpu_custom_call.1} parent=27 // pred_fallthru
                _
            $region28: #{tpu_custom_call.1} parent=23 // pred_fallthru
              _
            // Predicated region
            $region29: #{tpu_custom_call.1} parent=23 // pred_check
              _
            $region30: #{tpu_custom_call.1} parent=23 // pred_check_branch
              %152 = sbr.rel target = $region32
            $region31: #{tpu_custom_call.1} parent=23 // pred_region
              %s154 = ssub.s32 256, 1
              loop: start=0, step=1, limit=1
              $region33: #{tpu_custom_call.1} parent=31 // loop_pre_header
                _
              $region34: #{tpu_custom_call.1} parent=31 // loop_header
                %s156 = sphi 0, %s160
                %p157 = scmp.ge.s32.totalorder %s156, 1
                %s161 = sphi %s146, %s146
                %s162 = sphi %s140, %s140
              $region35: #{tpu_custom_call.1} parent=31 // loop_header_branch
                %159 = sbr.rel (%p157) target = $region39
              $region36: #{tpu_custom_call.1} parent=31 // loop_body
                %v163 = vld [vmem:[%s161] sm:%s154]
                %164 = vst [vmem:[%s162] sm:%s154] %v163
                %v165 = vld [vmem:[%s161 + $0x18] sm:%s154]
                %166 = vst [vmem:[%s162 + $0x8] sm:%s154] %v165
                %v167 = vld [vmem:[%s161 + $0x30] sm:%s154]
                %168 = vst [vmem:[%s162 + $0x10] sm:%s154] %v167
              $region37: #{tpu_custom_call.1} parent=31 // loop_footer
                %s160 = sadd.s32 1, %s156
              $region38: #{tpu_custom_call.1} parent=31 // loop_footer_branch
                %155 = sbr.rel target = $region34
              $region39: #{tpu_custom_call.1} parent=31 // loop_exit
                _
            $region32: #{tpu_custom_call.1} parent=23 // pred_fallthru
              _
          $region24: #{tpu_custom_call.1} parent=19 // pred_fallthru
            _
          %187 = vnop
        $region20: #{tpu_custom_call.1} parent=15 // pred_fallthru
          _
        // Predicated region
        $region55: #{tpu_custom_call.1} parent=15 // pred_check
          %p188 = pneg %p83
        $region56: #{tpu_custom_call.1} parent=15 // pred_check_branch
          %190 = sbr.rel (%p188) target = $region58
        $region57: #{tpu_custom_call.1} parent=15 // pred_region
          %s191 = smul.u32 %s16, 3
          %s192 = sadd.s32 %s191, %s17
          %p193 = scmp.lt.s32.totalorder %s192, 2
          %s194 = scalar_select %p193, %s192, 2
          %p195 = scmp.lt.s32.totalorder %s194, 2
          %s196 = scalar_select %p195, %s194, 2
          %s197 = smul.addr %s196, 8
          %s198 = scalar_lea.vmem %s1, %s197
          %s199 = smul.u32 %s16, 3
          %s200 = sadd.s32 %s199, %s17
          %p201 = scmp.lt.s32.totalorder %s200, 2
          %s202 = scalar_select %p201, %s200, 2
        $region58: #{tpu_custom_call.1} parent=15 // pred_fallthru
          _
      $region16: #{tpu_custom_call.1} parent=5 // pred_fallthru
        _
      %p203 = scmp.le.s32.totalorder 1, %s9
      %p204 = scmp.lt.s32.totalorder %s9, 4
      %p205 = pnand %p203, %p204
      %p206 = pneg %p205
      // Predicated region
      $region59: #{tpu_custom_call.1} parent=5 // pred_check
        _
      $region60: #{tpu_custom_call.1} parent=5 // pred_check_branch
        %208 = sbr.rel (%p205) target = $region62
      $region61: #{tpu_custom_call.1} parent=5 // pred_region
        %s209 = ssub.s32 %s9, 1
        %s210 = sand.u32 %s42, 1
        %s211 = sand.u32 %s42, 1
        %s212 = smul.addr %s211, 24
        %s213 = scalar_lea.vmem [#allocation3], %s212
        // Predicated region
        $region63: #{tpu_custom_call.1} parent=61 // pred_check
          %p214 = pneg %p55
        $region64: #{tpu_custom_call.1} parent=61 // pred_check_branch
          %216 = sbr.rel (%p214) target = $region66
        $region65: #{tpu_custom_call.1} parent=61 // pred_region
          _
        $region66: #{tpu_custom_call.1} parent=61 // pred_fallthru
          _
        %s217 = sand.u32 %s42, 1
        %s218 = sand.u32 %s42, 1
        %s219 = smul.addr %s218, 24
        %s220 = scalar_lea.vmem [#allocation3], %s219
        %p221 = pneg %p55
        %p222 = pneg %p52
        %s223 = smul.u32 %s18, 3
        %s224 = sadd.s32 %s223, %s19
        %p225 = scmp.lt.s32.totalorder %s224, 2
        %s226 = scalar_select %p225, %s224, 2
        %p227 = scmp.lt.s32.totalorder %s226, 2
        %s228 = scalar_select %p227, %s226, 2
        %s229 = smul.addr %s228, 8
        %s230 = scalar_lea.vmem %s1, %s229
        %p231 = pneg %p89
        %p232 = pneg %p86
        %p233 = pneg %p115
        %p234 = pneg %p112
        %s235 = smul.u32 %s18, 3
        %s236 = sadd.s32 %s235, %s19
        %p237 = scmp.lt.s32.totalorder %s236, 2
        %s238 = scalar_select %p237, %s236, 2
        %s239 = smul.u32 %s18, 3
        %s240 = sadd.s32 %s239, %s19
        %p241 = scmp.lt.s32.totalorder %s240, 2
        %s242 = scalar_select %p241, %s240, 2
        %p243 = scmp.lt.s32.totalorder %s242, 2
        %s244 = scalar_select %p243, %s242, 2
        %s245 = smul.addr %s244, 8
        %s246 = scalar_lea.vmem %s1, %s245
        %s247 = smul.u32 %s18, 3
        %s248 = sadd.s32 %s247, %s19
        %p249 = scmp.lt.s32.totalorder %s248, 2
        %s250 = scalar_select %p249, %s248, 2
        %p251 = scmp.eq.s32.totalorder %s19, 0
        // Predicated region
        $region67: #{tpu_custom_call.1} parent=61 // pred_check
          %p252 = pneg %p251
        $region68: #{tpu_custom_call.1} parent=61 // pred_check_branch
          %254 = sbr.rel (%p252) target = $region70
        $region69: #{tpu_custom_call.1} parent=61 // pred_region
          %255 = vst [vmem:[#allocation2] sm:$0xff] 0.0
        $region70: #{tpu_custom_call.1} parent=61 // pred_fallthru
          _
        %v256 = vld [vmem:[%s246] sm:$0xff]
        %v257 = vld [vmem:[%s213] sm:$0xff]
        %v258 = vsub.f32 %v256, %v257
        %v259 = vmul.f32 %v258, -0.9
        %v260 = vmul.f32 %v258, 0.1
        %v261 = vmax.f32 %v259, %v260
        %v262 = vadd.f32 %v261, 0.0
        %s263 = scalar_lea.vmem %s213, 8 [#allocation3]
        %v264 = vld [vmem:[%s263] sm:$0xff]
        %v265 = vsub.f32 %v256, %v264
        %v266 = vmul.f32 %v265, -0.5
        %v267 = vmul.f32 %v265, 0.5
        %v268 = vmax.f32 %v266, %v267
        %v269 = vadd.f32 %v262, %v268
        %s270 = scalar_lea.vmem %s213, 16 [#allocation3]
        %v271 = vld [vmem:[%s270] sm:$0xff]
        %v272 = vsub.f32 %v256, %v271
        %v273 = vmul.f32 %v272, -0.1
        %v274 = vmul.f32 %v272, 0.9
        %v275 = vmax.f32 %v273, %v274
        %v276 = vadd.f32 %v269, %v275
        %s277 = smul.u32 %s18, 3
        %s278 = sadd.s32 %s277, %s19
        %s279 = smul.u32 %s278, 8
        %s280 = sadd.s32 %s279, 8
        %p281 = scmp.le.s32.totalorder %s280, 17
        %p282 = scmp.lt.s32.totalorder %s279, 17
        %p283 = scmp.gt.s32.totalorder %s280, 17
        %p284 = pnand %p282, %p283
        %p285 = pneg %p284
        // Predicated region
        $region71: #{tpu_custom_call.1} parent=61 // pred_check
          %p286 = pneg %p281
        $region72: #{tpu_custom_call.1} parent=61 // pred_check_branch
          %288 = sbr.rel (%p286) target = $region74
        $region73: #{tpu_custom_call.1} parent=61 // pred_region
          %v289 = vld [vmem:[#allocation2] sm:$0xff]
          %v290 = vadd.f32 %v276, 0.0
          %v291 = vadd.f32 %v289, %v290
          %292 = vst [vmem:[#allocation2] sm:$0xff] %v291
        $region74: #{tpu_custom_call.1} parent=61 // pred_fallthru
          _
        // Predicated region
        $region75: #{tpu_custom_call.1} parent=61 // pred_check
          _
        $region76: #{tpu_custom_call.1} parent=61 // pred_check_branch
          %294 = sbr.rel (%p284) target = $region78
        $region77: #{tpu_custom_call.1} parent=61 // pred_region
          %v295 = vlaneseq
          %v296 = vshrl.u32 %v295, 7
          %v297 = vstv %s279
          %v298 = vadd.s32 %v297, %v296
          %v299 = vld [vmem:[#allocation2] sm:$0xff]
          %vm300 = vcmp.lt.s32.totalorder %v298, 17
          %v301 = vsel %vm300, %v276, 0.0
          %v302 = vadd.f32 %v301, 0.0
          %v303 = vadd.f32 %v299, %v302
          %304 = vst [vmem:[#allocation2] sm:$0xff] %v303
        $region78: #{tpu_custom_call.1} parent=61 // pred_fallthru
          _
        %p305 = scmp.eq.s32.totalorder %s19, 2
        // Predicated region
        $region79: #{tpu_custom_call.1} parent=61 // pred_check
          %p306 = pneg %p305
        $region80: #{tpu_custom_call.1} parent=61 // pred_check_branch
          %308 = sbr.rel (%p306) target = $region82
        $region81: #{tpu_custom_call.1} parent=61 // pred_region
          %v309 = vld [vmem:[#allocation2] sm:$0xff]
          %310 = vst [vmem:[#allocation4] sm:$0xff] %v309
        $region82: #{tpu_custom_call.1} parent=61 // pred_fallthru
          _
        // Predicated region
        $region83: #{tpu_custom_call.1} parent=61 // pred_check
          %p311 = pneg %p112
        $region84: #{tpu_custom_call.1} parent=61 // pred_check_branch
          %313 = sbr.rel (%p311) target = $region86
        $region85: #{tpu_custom_call.1} parent=61 // pred_region
          %315 = vsyncadd [#allocation5], 0
          %s316 = smul.addr %s18, 8
          %s317 = scalar_lea.hbm %s2, %s316
          %s319 = sshll.u32 [#allocation4], 4
          %s320 = int_to_ptr.vmem [resolvable:$true] %s319
          %s321 = sshll.u32 %s317, 4
          %s322 = int_to_ptr.hbm [resolvable:$true] %s321
          %324 = dma.vmem_to_hbm [thread:$0]  %s320, 128, %s322, [#allocation5]
        $region86: #{tpu_custom_call.1} parent=61 // pred_fallthru
          _
        // Predicated region
        $region87: #{tpu_custom_call.1} parent=61 // pred_check
          %p325 = pneg %p112
        $region88: #{tpu_custom_call.1} parent=61 // pred_check_branch
          %327 = sbr.rel (%p325) target = $region90
        $region89: #{tpu_custom_call.1} parent=61 // pred_region
          %329 = dma.done [#allocation5], 128
        $region90: #{tpu_custom_call.1} parent=61 // pred_fallthru
          _
      $region62: #{tpu_custom_call.1} parent=5 // pred_fallthru
        _
      %p330 = scmp.le.s32.totalorder 2, %s9
      // Predicated region
      $region91: #{tpu_custom_call.1} parent=5 // pred_check
        %p331 = pneg %p330
      $region92: #{tpu_custom_call.1} parent=5 // pred_check_branch
        %333 = sbr.rel (%p331) target = $region94
      $region93: #{tpu_custom_call.1} parent=5 // pred_region
        %s334 = ssub.s32 %s9, 2
      $region94: #{tpu_custom_call.1} parent=5 // pred_fallthru
        _
    $region6: #{tpu_custom_call.1} parent=1 // loop_footer
      %s13 = sadd.s32 1, %s9
    $region7: #{tpu_custom_call.1} parent=1 // loop_footer_branch
      %8 = sbr.rel target = $region3
    $region8: #{tpu_custom_call.1} parent=1 // loop_exit
      _
    %335 = vsyncpa [#allocation5], 1
    %s336 = scalar_lea.sflag [#allocation5], 1
    %337 = vsyncpa %s336, 1

</llo_original>
